<compile_context>
chip_gen: v7x
topology: tpu7x:2x2x1
jax: 0.10.0
libtpu: 0.0.40
codegen_flags: <defaults>
</compile_context>

<pallas_src>
import jax
import jax.numpy as jnp
from jax.experimental import pallas as pl
from jax.experimental.pallas import tpu as pltpu


def _pick_tile_n(N, K, Cin, *, x_bytes=2, budget=1 << 20):
    """Largest N-tile that (a) divides N, (b) keeps the bf16 x tile under
    `budget` bytes, and (c) keeps the lane-dense output BlockSpec legal
    (TILE_N % 128 == 0 or TILE_N == N)."""
    cap = max(1, budget // (K * Cin * x_bytes))
    if N <= cap:
        return N
    for t in range(cap, 0, -1):
        if N % t == 0 and t % 128 == 0:
            return t
    return N  # fallback: full-N tile (always BlockSpec-legal)


def _attn_pool_conv_kernel(x_ref, wsT_ref, wc_ref, b_ref, y_ref, s1_ref, s2_ref):
    """One (batch b, N-tile t) grid step.

    x_ref:   (1, TN, K, Cin)  bf16   channels-last input tile
    wsT_ref: (Cin, Cin)       bf16   pre-transposed score Linear weight (W^T)
    wc_ref:  (Cout, Cin)      f32    1x1 Conv2d weight
    b_ref:   (Cout, 1)        f32    Conv2d bias
    y_ref:   (1, Cout, TN)    f32    lane-dense pre-BN conv output
    s1_ref:  (1, 1, Cout, 1)  f32    per-tile per-channel sum   (BN stats)
    s2_ref:  (1, 1, Cout, 1)  f32    per-tile per-channel sum^2 (BN stats)
    """
    x3 = x_ref[0]                                   # (TN, K, Cin) bf16
    TN, K, Cin = x3.shape

    # score Linear (no bias): s = x @ W^T  -- bf16 MXU inputs, f32 accumulate
    x2d = x3.reshape(TN * K, Cin)
    s = jnp.dot(x2d, wsT_ref[...], preferred_element_type=jnp.float32)
    s = s.reshape(TN, K, Cin)

    # softmax over K with the 1/denominator folded *after* the pooling sum
    # (K-times fewer divides than normalizing p itself).
    s_max = jnp.max(s, axis=1, keepdims=True)
    p = jnp.exp(s - s_max)                          # (TN, K, Cin) f32
    denom = jnp.sum(p, axis=1)                      # (TN, Cin)
    xf = x3.astype(jnp.float32)
    unnorm = jnp.sum(p * xf, axis=1)                # (TN, Cin)
    # NOTE: pl.reciprocal(denom, approx=True) would push this onto the (idle)
    # EUP slot; kept exact here so the result tracks the f32 reference tightly.
    feats = unnorm / denom                          # (TN, Cin)

    # Transpose once so N sits on the lane axis; the conv matmul then lands
    # directly in the lane-dense (Cout, TN) output layout (no weight .T,
    # no masked narrow-Cout stores).
    feats_t = feats.T                               # (Cin, TN)
    y_t = jnp.dot(wc_ref[...], feats_t, preferred_element_type=jnp.float32)
    y_t = y_t + b_ref[...]                          # (Cout, TN) + (Cout, 1)

    y_ref[0] = y_t
    # Per-tile BN partial statistics -- conv output never needs a second
    # stats-only pass over HBM.
    s1_ref[0, 0] = jnp.sum(y_t, axis=1, keepdims=True)
    s2_ref[0, 0] = jnp.sum(y_t * y_t, axis=1, keepdims=True)


def _bn_relu_kernel(y_ref, scale_ref, shift_ref, o_ref):
    """Fused affine-normalize + ReLU on lane-dense (Cout, TN) tiles.

    y_ref:     (1, Cout, TN) f32
    scale_ref: (Cout, 1)     f32   gamma / sqrt(var + eps)
    shift_ref: (Cout, 1)     f32   beta - mean * scale
    o_ref:     (1, Cout, TN) f32
    """
    o_ref[0] = jnp.maximum(y_ref[0] * scale_ref[...] + shift_ref[...], 0.0)


def attentive_pooling(x_nchw, w_score, w_conv, b_conv, gamma, beta, *, eps=1e-6):
    """x_nchw: (B, Cin, N, K) -> (B, Cout, N, 1), matching the PyTorch module."""
    B, Cin, N, K = x_nchw.shape
    Cout = w_conv.shape[0]

    tn = _pick_tile_n(N, K, Cin)
    nt = N // tn
    grid = (B, nt)

    # Layout / dtype plumbing (XLA glue, done once):
    #  - channels-last, bf16 in HBM for the large x tensor
    #  - score weight pre-transposed (kernel computes x @ W^T directly)
    x = jnp.transpose(x_nchw, (0, 2, 3, 1)).astype(jnp.bfloat16)   # (B, N, K, Cin)
    wsT = jnp.transpose(w_score).astype(jnp.bfloat16)              # (Cin, Cin)
    wc = w_conv.astype(jnp.float32)                                # (Cout, Cin)
    bc = b_conv.astype(jnp.float32).reshape(Cout, 1)

    y, s1, s2 = pl.pallas_call(
        _attn_pool_conv_kernel,
        out_shape=(
            jax.ShapeDtypeStruct((B, Cout, N), jnp.float32),
            jax.ShapeDtypeStruct((B, nt, Cout, 1), jnp.float32),
            jax.ShapeDtypeStruct((B, nt, Cout, 1), jnp.float32),
        ),
        grid_spec=pltpu.PrefetchScalarGridSpec(
            num_scalar_prefetch=0,
            grid=grid,
            in_specs=[
                pl.BlockSpec((1, tn, K, Cin), lambda b, t: (b, t, 0, 0)),
                pl.BlockSpec((Cin, Cin), lambda b, t: (0, 0)),
                pl.BlockSpec((Cout, Cin), lambda b, t: (0, 0)),
                pl.BlockSpec((Cout, 1), lambda b, t: (0, 0)),
            ],
            out_specs=(
                pl.BlockSpec((1, Cout, tn), lambda b, t: (b, 0, t)),
                pl.BlockSpec((1, 1, Cout, 1), lambda b, t: (b, t, 0, 0)),
                pl.BlockSpec((1, 1, Cout, 1), lambda b, t: (b, t, 0, 0)),
            ),
        ),
        compiler_params=pltpu.CompilerParams(
            dimension_semantics=("parallel", "parallel"),
            vmem_limit_bytes=32 * 1024 * 1024,
        ),
    )(x, wsT, wc, bc)

    # Tiny O(Cout) cross-tile reduction -> train-mode BN (biased var, eps=1e-6)
    # folded into a single per-channel scale/shift.
    count = jnp.float32(B * N)
    tot = jnp.sum(s1, axis=(0, 1))                  # (Cout, 1)
    tot_sq = jnp.sum(s2, axis=(0, 1))               # (Cout, 1)
    mean = tot / count
    var = tot_sq / count - mean * mean              # biased variance
    invstd = jax.lax.rsqrt(var + eps)
    scale = gamma.astype(jnp.float32).reshape(Cout, 1) * invstd
    shift = beta.astype(jnp.float32).reshape(Cout, 1) - mean * scale

    out = pl.pallas_call(
        _bn_relu_kernel,
        out_shape=jax.ShapeDtypeStruct((B, Cout, N), jnp.float32),
        grid_spec=pltpu.PrefetchScalarGridSpec(
            num_scalar_prefetch=0,
            grid=grid,
            in_specs=[
                pl.BlockSpec((1, Cout, tn), lambda b, t: (b, 0, t)),
                pl.BlockSpec((Cout, 1), lambda b, t: (0, 0)),
                pl.BlockSpec((Cout, 1), lambda b, t: (0, 0)),
            ],
            out_specs=pl.BlockSpec((1, Cout, tn), lambda b, t: (b, 0, t)),
        ),
        compiler_params=pltpu.CompilerParams(
            dimension_semantics=("parallel", "parallel"),
            vmem_limit_bytes=32 * 1024 * 1024,
        ),
    )(y, scale, shift)

    # already (B, Cout, N) -- just append the singleton K dim (no transpose).
    return out[..., None]


def _reference(x_nchw, w_score, w_conv, b_conv, gamma, beta, eps=1e-6):
    """Pure-JAX reference mirroring the PyTorch forward (train-mode BN).

    x and the score weight are quantized to bf16 exactly as the kernel path
    feeds them, so the comparison isolates kernel correctness (bf16 values are
    exactly representable in f32; remaining diffs are accumulation-order only).
    """
    xq = jnp.transpose(x_nchw, (0, 2, 3, 1)).astype(jnp.bfloat16).astype(jnp.float32)
    wsq = w_score.astype(jnp.bfloat16).astype(jnp.float32)
    s = jnp.einsum('bnkc,dc->bnkd', xq, wsq)
    scores = jax.nn.softmax(s, axis=2)                            # softmax over K
    feats = jnp.sum(scores * xq, axis=2)                          # (B, N, Cin)
    y = jnp.einsum('bnc,oc->bno', feats, w_conv) + b_conv
    mean = jnp.mean(y, axis=(0, 1), keepdims=True)
    var = jnp.mean((y - mean) ** 2, axis=(0, 1), keepdims=True)   # biased
    yn = (y - mean) / jnp.sqrt(var + eps) * gamma + beta
    out = jnp.maximum(yn, 0.0)
    return jnp.transpose(out, (0, 2, 1))[..., None]


if __name__ == "__main__":
    B, Cin, N, K, Cout = 2, 8, 16, 8, 16

    key = jax.random.PRNGKey(0)
    kx, kw1, kw2, kb = jax.random.split(key, 4)

    x = jax.random.normal(kx, (B, Cin, N, K), dtype=jnp.float32)
    # nn.Linear(in_channels, in_channels, bias=False): weight (Cin, Cin)
    w_score = jax.random.normal(kw1, (Cin, Cin), dtype=jnp.float32) * 0.1
    # nn.Conv2d(in_channels, out_channels, 1): weight (Cout, Cin, 1, 1) -> (Cout, Cin)
    w_conv = jax.random.normal(kw2, (Cout, Cin), dtype=jnp.float32) * 0.1
    b_conv = jax.random.normal(kb, (Cout,), dtype=jnp.float32) * 0.1
    # BatchNorm2d default-initialized affine params
    gamma = jnp.ones((Cout,), dtype=jnp.float32)
    beta = jnp.zeros((Cout,), dtype=jnp.float32)

    out = attentive_pooling(x, w_score, w_conv, b_conv, gamma, beta)
    out = jax.block_until_ready(out)

    ref = _reference(x, w_score, w_conv, b_conv, gamma, beta)
    assert out.shape == (B, Cout, N, 1), out.shape
    max_err = float(jnp.max(jnp.abs(out - ref)))
    assert jnp.allclose(out, ref, atol=2e-3, rtol=2e-3), max_err

    print("KERNEL_OK")
</pallas_src>

<mosaic_0001>
module attributes {stable_mosaic.version = 11 : i64} {
  func.func @_attn_pool_conv_kernel(%arg0: i32, %arg1: i32, %arg2: memref<1x16x8x8xbf16, #tpu.memory_space<vmem>>, %arg3: memref<8x8xbf16, #tpu.memory_space<vmem>>, %arg4: memref<16x8xf32, #tpu.memory_space<vmem>>, %arg5: memref<16x1xf32, #tpu.memory_space<vmem>>, %arg6: memref<1x16x16xf32, #tpu.memory_space<vmem>>, %arg7: memref<1x1x16x1xf32, #tpu.memory_space<vmem>>, %arg8: memref<1x1x16x1xf32, #tpu.memory_space<vmem>>) attributes {dimension_semantics = [#tpu.dimension_semantics<parallel>, #tpu.dimension_semantics<parallel>], iteration_bounds = array<i64: 2, 1>, scalar_prefetch = 0 : i64, scratch_operands = 0 : i64, tpu.core_type = #tpu.core_type<tc>, window_params = [{transform_indices = @transform_0, window_bounds = array<i64: 1, 16, 8, 8>}, {pipeline_mode = #tpu.pipeline_mode<synchronous>, transform_indices = @transform_1, window_bounds = array<i64: 8, 8>}, {pipeline_mode = #tpu.pipeline_mode<synchronous>, transform_indices = @transform_2, window_bounds = array<i64: 16, 8>}, {pipeline_mode = #tpu.pipeline_mode<synchronous>, transform_indices = @transform_3, window_bounds = array<i64: 16, 1>}, {transform_indices = @transform_4, window_bounds = array<i64: 1, 16, 16>}, {transform_indices = @transform_5, window_bounds = array<i64: 1, 1, 16, 1>}, {transform_indices = @transform_6, window_bounds = array<i64: 1, 1, 16, 1>}]} {
    %c0 = arith.constant 0 : index
    %c0_0 = arith.constant 0 : index
    %c0_1 = arith.constant 0 : index
    %c0_2 = arith.constant 0 : index
    %0 = vector.load %arg2[%c0, %c0_0, %c0_1, %c0_2] : memref<1x16x8x8xbf16, #tpu.memory_space<vmem>>, vector<1x16x8x8xbf16>
    %1 = vector.shape_cast %0 : vector<1x16x8x8xbf16> to vector<16x8x8xbf16>
    %2 = vector.shape_cast %1 : vector<16x8x8xbf16> to vector<128x8xbf16>
    %c0_3 = arith.constant 0 : index
    %c0_4 = arith.constant 0 : index
    %3 = vector.load %arg3[%c0_3, %c0_4] : memref<8x8xbf16, #tpu.memory_space<vmem>>, vector<8x8xbf16>
    %cst = arith.constant dense<0.000000e+00> : vector<128x8xf32>
    %4 = tpu.matmul %2, %3, %cst {dimension_numbers = #tpu.dot_dimension_numbers<[1], [0], [0], [1], [0, 0, 1, 1], [], []>} : vector<128x8xbf16>, vector<8x8xbf16>, vector<128x8xf32> -> vector<128x8xf32>
    %5 = vector.shape_cast %4 : vector<128x8xf32> to vector<16x8x8xf32>
    %cst_5 = arith.constant dense<0xFF800000> : vector<16x8xf32>
    %6 = vector.multi_reduction <maximumf>, %5, %cst_5 [1] : vector<16x8x8xf32> to vector<16x8xf32>
    %7 = vector.shape_cast %6 : vector<16x8xf32> to vector<16x1x8xf32>
    %8 = vector.broadcast %7 : vector<16x1x8xf32> to vector<16x8x8xf32>
    %9 = arith.subf %5, %8 : vector<16x8x8xf32>
    %10 = math.exp %9 : vector<16x8x8xf32>
    %cst_6 = arith.constant dense<0.000000e+00> : vector<16x8xf32>
    %11 = vector.multi_reduction <add>, %10, %cst_6 [1] : vector<16x8x8xf32> to vector<16x8xf32>
    %12 = arith.extf %1 : vector<16x8x8xbf16> to vector<16x8x8xf32>
    %13 = arith.mulf %10, %12 : vector<16x8x8xf32>
    %cst_7 = arith.constant dense<0.000000e+00> : vector<16x8xf32>
    %14 = vector.multi_reduction <add>, %13, %cst_7 [1] : vector<16x8x8xf32> to vector<16x8xf32>
    %15 = arith.divf %14, %11 : vector<16x8xf32>
    %16 = tpu.transpose %15, [1, 0] : vector<16x8xf32> -> vector<8x16xf32>
    %c0_8 = arith.constant 0 : index
    %c0_9 = arith.constant 0 : index
    %17 = vector.load %arg4[%c0_8, %c0_9] : memref<16x8xf32, #tpu.memory_space<vmem>>, vector<16x8xf32>
    %cst_10 = arith.constant dense<0.000000e+00> : vector<16x16xf32>
    %18 = tpu.matmul %17, %16, %cst_10 {dimension_numbers = #tpu.dot_dimension_numbers<[1], [0], [0], [1], [0, 0, 1, 1], [], []>} : vector<16x8xf32>, vector<8x16xf32>, vector<16x16xf32> -> vector<16x16xf32>
    %c0_11 = arith.constant 0 : index
    %c0_12 = arith.constant 0 : index
    %19 = vector.load %arg5[%c0_11, %c0_12] : memref<16x1xf32, #tpu.memory_space<vmem>>, vector<16x1xf32>
    %20 = vector.broadcast %19 : vector<16x1xf32> to vector<16x16xf32>
    %21 = arith.addf %18, %20 : vector<16x16xf32>
    %c0_13 = arith.constant 0 : index
    %c0_14 = arith.constant 0 : index
    %c0_15 = arith.constant 0 : index
    %22 = vector.load %arg6[%c0_13, %c0_14, %c0_15] : memref<1x16x16xf32, #tpu.memory_space<vmem>>, vector<1x16x16xf32>
    %23 = vector.shape_cast %22 : vector<1x16x16xf32> to vector<16x16xf32>
    %24 = vector.shape_cast %21 : vector<16x16xf32> to vector<1x16x16xf32>
    tpu.vector_store %arg6[%c0_13, %c0_14, %c0_15], %24 {strides = array<i32>} : memref<1x16x16xf32, #tpu.memory_space<vmem>>, vector<1x16x16xf32>,
    %cst_16 = arith.constant dense<0.000000e+00> : vector<16xf32>
    %25 = vector.multi_reduction <add>, %21, %cst_16 [1] : vector<16x16xf32> to vector<16xf32>
    %26 = vector.shape_cast %25 : vector<16xf32> to vector<16x1xf32>
    %c0_17 = arith.constant 0 : index
    %c0_18 = arith.constant 0 : index
    %c0_19 = arith.constant 0 : index
    %c0_20 = arith.constant 0 : index
    %27 = vector.load %arg7[%c0_17, %c0_18, %c0_19, %c0_20] : memref<1x1x16x1xf32, #tpu.memory_space<vmem>>, vector<1x1x16x1xf32>
    %28 = vector.shape_cast %27 : vector<1x1x16x1xf32> to vector<16x1xf32>
    %29 = vector.shape_cast %26 : vector<16x1xf32> to vector<1x1x16x1xf32>
    tpu.vector_store %arg7[%c0_17, %c0_18, %c0_19, %c0_20], %29 {strides = array<i32>} : memref<1x1x16x1xf32, #tpu.memory_space<vmem>>, vector<1x1x16x1xf32>,
    %30 = arith.mulf %21, %21 : vector<16x16xf32>
    %cst_21 = arith.constant dense<0.000000e+00> : vector<16xf32>
    %31 = vector.multi_reduction <add>, %30, %cst_21 [1] : vector<16x16xf32> to vector<16xf32>
    %32 = vector.shape_cast %31 : vector<16xf32> to vector<16x1xf32>
    %c0_22 = arith.constant 0 : index
    %c0_23 = arith.constant 0 : index
    %c0_24 = arith.constant 0 : index
    %c0_25 = arith.constant 0 : index
    %33 = vector.load %arg8[%c0_22, %c0_23, %c0_24, %c0_25] : memref<1x1x16x1xf32, #tpu.memory_space<vmem>>, vector<1x1x16x1xf32>
    %34 = vector.shape_cast %33 : vector<1x1x16x1xf32> to vector<16x1xf32>
    %35 = vector.shape_cast %32 : vector<16x1xf32> to vector<1x1x16x1xf32>
    tpu.vector_store %arg8[%c0_22, %c0_23, %c0_24, %c0_25], %35 {strides = array<i32>} : memref<1x1x16x1xf32, #tpu.memory_space<vmem>>, vector<1x1x16x1xf32>,
    return
  }
  func.func @transform_0(%arg0: i32, %arg1: i32) -> (i32, i32, i32, i32) {
    %c0_i32 = arith.constant 0 : i32
    %c0_i32_0 = arith.constant 0 : i32
    %c0_i32_1 = arith.constant 0 : i32
    return %arg0, %arg1, %c0_i32, %c0_i32_0 : i32, i32, i32, i32
  }
  func.func @transform_1(%arg0: i32, %arg1: i32) -> (i32, i32) {
    %c0_i32 = arith.constant 0 : i32
    %c0_i32_0 = arith.constant 0 : i32
    %c0_i32_1 = arith.constant 0 : i32
    return %c0_i32, %c0_i32_0 : i32, i32
  }
  func.func @transform_2(%arg0: i32, %arg1: i32) -> (i32, i32) {
    %c0_i32 = arith.constant 0 : i32
    %c0_i32_0 = arith.constant 0 : i32
    %c0_i32_1 = arith.constant 0 : i32
    return %c0_i32, %c0_i32_0 : i32, i32
  }
  func.func @transform_3(%arg0: i32, %arg1: i32) -> (i32, i32) {
    %c0_i32 = arith.constant 0 : i32
    %c0_i32_0 = arith.constant 0 : i32
    %c0_i32_1 = arith.constant 0 : i32
    return %c0_i32, %c0_i32_0 : i32, i32
  }
  func.func @transform_4(%arg0: i32, %arg1: i32) -> (i32, i32, i32) {
    %c0_i32 = arith.constant 0 : i32
    %c0_i32_0 = arith.constant 0 : i32
    return %arg0, %c0_i32, %arg1 : i32, i32, i32
  }
  func.func @transform_5(%arg0: i32, %arg1: i32) -> (i32, i32, i32, i32) {
    %c0_i32 = arith.constant 0 : i32
    %c0_i32_0 = arith.constant 0 : i32
    %c0_i32_1 = arith.constant 0 : i32
    return %arg0, %arg1, %c0_i32, %c0_i32_0 : i32, i32, i32, i32
  }
  func.func @transform_6(%arg0: i32, %arg1: i32) -> (i32, i32, i32, i32) {
    %c0_i32 = arith.constant 0 : i32
    %c0_i32_0 = arith.constant 0 : i32
    %c0_i32_1 = arith.constant 0 : i32
    return %arg0, %arg1, %c0_i32, %c0_i32_0 : i32, i32, i32, i32
  }
}

</mosaic_0001>

<llo_original>
// kernel: tpu_custom_call.1
$region0: #{tpu_custom_call.1}
  #allocation0 [shape = 'u32[]', space=smem, size = 0x4, offset = 0x4, fixed_abs, tag = 'smem constant byte address 0x4 - core index']
  #allocation1 [shape = 'u32[144,128]{1,0:T(1,128)}', space=vmem, size = 0x12000, scoped, tag = 'internal scratch']
  %s0 = inlined_call_operand.vmem [shape: bf16[2,16,8,8], index: 0, kind: input, shape index: {}]
  %s1 = inlined_call_operand.vmem [shape: bf16[8,8], index: 1, kind: input, shape index: {}]
  %s2 = inlined_call_operand.vmem [shape: f32[16,8], index: 2, kind: input, shape index: {}]
  %s3 = inlined_call_operand.vmem [shape: f32[16,1], index: 3, kind: input, shape index: {}]
  %s4 = inlined_call_operand.hbm [shape: f32[2,16,16], index: 4, kind: output, shape index: {0}]
  %s5 = inlined_call_operand.vmem [shape: f32[2,1,16,1], index: 5, kind: output, shape index: {1}]
  %s6 = inlined_call_operand.vmem [shape: f32[2,1,16,1], index: 6, kind: output, shape index: {2}]
  %7 = xla_tuple %s4, %s5, %s6
  %s8 = sld [smem:[#allocation0]]
  $region65: #{tpu_custom_call.1} parent=0
    _
  %s10 = ssub.s32 1, %s8
  %s11 = scalar_select 0, %s10, %s8
  $region1: #{tpu_custom_call.1} parent=0
    #allocation2 [shape = 'u8[16384]{0}', space=vmem, size = 0x4000, scoped, tag = 'output window, operand 0']
    #allocation3 [shape = 's32[2]{0}', space=sflag, size = 0x8, scoped, tag = 'scoped memory for tpu_custom_call.1']
    %12 = vsyncpa [#allocation3], 0
    %s13 = scalar_lea.sflag [#allocation3], 1
    %14 = vsyncpa %s13, 0
    loop: start=0, step=1, limit=4
    $region2: #{tpu_custom_call.1} parent=1 // loop_pre_header
      _
    $region3: #{tpu_custom_call.1} parent=1 // loop_header
      %s16 = sphi 0, %s20
      %p17 = scmp.ge.s32.totalorder %s16, 4
      %s23 = sphi 0, %s35
      %s24 = sphi 0, %s31
      %s25 = sphi 0, %s23
      %s26 = sphi 0, %s24
      %s27 = sphi 0, %s25
      %s28 = sphi 0, %s26
      %s40 = sphi 0, %s42
      %s43 = sphi 0, %s40
      %s44 = sphi 0, %s43
      %s60 = sphi 0, %s44
      %s64 = sphi 0, %s64
      %s66 = sphi 0, %s64
      %s67 = sphi 0, %s66
      %s81 = sphi 0, %s67
      %s85 = sphi 0, %s85
      %s87 = sphi 0, %s85
      %s88 = sphi 0, %s87
      %s102 = sphi 0, %s88
      %s106 = sphi 0, %s106
      %s108 = sphi 0, %s106
      %s109 = sphi 0, %s108
      %s123 = sphi 0, %s109
      %s131 = sphi 0, %s133
      %s134 = sphi 0, %s131
      %s135 = sphi 0, %s134
      %s151 = sphi 0, %s135
      %s159 = sphi 0, %s161
      %s162 = sphi 0, %s159
      %s163 = sphi 0, %s162
      %s179 = sphi 0, %s163
      %s187 = sphi 0, %s189
      %s190 = sphi 0, %s187
      %s191 = sphi 0, %s190
      %s207 = sphi 0, %s191
    $region4: #{tpu_custom_call.1} parent=1 // loop_header_branch
      %19 = sbr.rel (%p17) target = $region8
    $region5: #{tpu_custom_call.1} parent=1 // loop_body
      %s21 = ssub.s32 %s16, 1
      %s22 = ssub.s32 %s16, 2
      %s29 = sadd.s32 1, %s24
      %p30 = scmp.ge.s32.totalorder %s29, 1
      %s31 = scalar_select %p30, 0, %s29
      %s32 = sadd.s32 1, %s23
      %s33 = scalar_select %p30, %s32, %s23
      %p34 = scmp.ge.s32.totalorder %s33, 2
      %s35 = scalar_select %p34, 0, %s33
      %s36 = ssub.s32 %s23, %s35
      %s37 = ssub.s32 %s24, %s31
      %s38 = sor.u32 %s36, %s37
      %p39 = scmp.eq.s32.totalorder %s38, 0
      %s41 = sadd.s32 %s40, 1
      %s42 = scalar_select %p39, %s40, %s41
      %p45 = pneg %p39
      %p46 = scmp.eq.s32.totalorder %s16, 1
      %p47 = por %p45, %p46
      %p48 = scmp.ne.s32.totalorder %s40, %s43
      %p49 = scmp.eq.s32.totalorder %s16, 0
      %p50 = por %p48, %p49
      %p51 = scmp.ne.s32.totalorder %s40, %s43
      %p52 = scmp.eq.s32.totalorder %s21, 1
      %p53 = por %p51, %p52
      %p54 = scmp.ne.s32.totalorder %s43, %s44
      %p55 = scmp.eq.s32.totalorder %s21, 0
      %p56 = por %p54, %p55
      %p57 = scmp.ne.s32.totalorder %s43, %s44
      %p58 = scmp.eq.s32.totalorder %s22, 1
      %p59 = por %p57, %p58
      %p61 = scmp.ne.s32.totalorder %s44, %s60
      %p62 = scmp.eq.s32.totalorder %s22, 0
      %p63 = por %p61, %p62
      %s65 = sadd.s32 %s64, 1
      %p68 = scmp.eq.s32.totalorder %s16, 1
      %p69 = scmp.ne.s32.totalorder %s64, %s66
      %p70 = scmp.eq.s32.totalorder %s16, 0
      %p71 = por %p69, %p70
      %p72 = scmp.ne.s32.totalorder %s64, %s66
      %p73 = scmp.eq.s32.totalorder %s21, 1
      %p74 = por %p72, %p73
      %p75 = scmp.ne.s32.totalorder %s66, %s67
      %p76 = scmp.eq.s32.totalorder %s21, 0
      %p77 = por %p75, %p76
      %p78 = scmp.ne.s32.totalorder %s66, %s67
      %p79 = scmp.eq.s32.totalorder %s22, 1
      %p80 = por %p78, %p79
      %p82 = scmp.ne.s32.totalorder %s67, %s81
      %p83 = scmp.eq.s32.totalorder %s22, 0
      %p84 = por %p82, %p83
      %s86 = sadd.s32 %s85, 1
      %p89 = scmp.eq.s32.totalorder %s16, 1
      %p90 = scmp.ne.s32.totalorder %s85, %s87
      %p91 = scmp.eq.s32.totalorder %s16, 0
      %p92 = por %p90, %p91
      %p93 = scmp.ne.s32.totalorder %s85, %s87
      %p94 = scmp.eq.s32.totalorder %s21, 1
      %p95 = por %p93, %p94
      %p96 = scmp.ne.s32.totalorder %s87, %s88
      %p97 = scmp.eq.s32.totalorder %s21, 0
      %p98 = por %p96, %p97
      %p99 = scmp.ne.s32.totalorder %s87, %s88
      %p100 = scmp.eq.s32.totalorder %s22, 1
      %p101 = por %p99, %p100
      %p103 = scmp.ne.s32.totalorder %s88, %s102
      %p104 = scmp.eq.s32.totalorder %s22, 0
      %p105 = por %p103, %p104
      %s107 = sadd.s32 %s106, 1
      %p110 = scmp.eq.s32.totalorder %s16, 1
      %p111 = scmp.ne.s32.totalorder %s106, %s108
      %p112 = scmp.eq.s32.totalorder %s16, 0
      %p113 = por %p111, %p112
      %p114 = scmp.ne.s32.totalorder %s106, %s108
      %p115 = scmp.eq.s32.totalorder %s21, 1
      %p116 = por %p114, %p115
      %p117 = scmp.ne.s32.totalorder %s108, %s109
      %p118 = scmp.eq.s32.totalorder %s21, 0
      %p119 = por %p117, %p118
      %p120 = scmp.ne.s32.totalorder %s108, %s109
      %p121 = scmp.eq.s32.totalorder %s22, 1
      %p122 = por %p120, %p121
      %p124 = scmp.ne.s32.totalorder %s109, %s123
      %p125 = scmp.eq.s32.totalorder %s22, 0
      %p126 = por %p124, %p125
      %s127 = ssub.s32 %s23, %s35
      %s128 = ssub.s32 %s24, %s31
      %s129 = sor.u32 %s127, %s128
      %p130 = scmp.eq.s32.totalorder %s129, 0
      %s132 = sadd.s32 %s131, 1
      %s133 = scalar_select %p130, %s131, %s132
      %p136 = pneg %p130
      %p137 = scmp.eq.s32.totalorder %s16, 1
      %p138 = por %p136, %p137
      %p139 = scmp.ne.s32.totalorder %s131, %s134
      %p140 = scmp.eq.s32.totalorder %s16, 0
      %p141 = por %p139, %p140
      %p142 = scmp.ne.s32.totalorder %s131, %s134
      %p143 = scmp.eq.s32.totalorder %s21, 1
      %p144 = por %p142, %p143
      %p145 = scmp.ne.s32.totalorder %s134, %s135
      %p146 = scmp.eq.s32.totalorder %s21, 0
      %p147 = por %p145, %p146
      %p148 = scmp.ne.s32.totalorder %s134, %s135
      %p149 = scmp.eq.s32.totalorder %s22, 1
      %p150 = por %p148, %p149
      %p152 = scmp.ne.s32.totalorder %s135, %s151
      %p153 = scmp.eq.s32.totalorder %s22, 0
      %p154 = por %p152, %p153
      %s155 = ssub.s32 %s23, %s35
      %s156 = ssub.s32 %s24, %s31
      %s157 = sor.u32 %s155, %s156
      %p158 = scmp.eq.s32.totalorder %s157, 0
      %s160 = sadd.s32 %s159, 1
      %s161 = scalar_select %p158, %s159, %s160
      %p164 = pneg %p158
      %p165 = scmp.eq.s32.totalorder %s16, 1
      %p166 = por %p164, %p165
      %p167 = scmp.ne.s32.totalorder %s159, %s162
      %p168 = scmp.eq.s32.totalorder %s16, 0
      %p169 = por %p167, %p168
      %p170 = scmp.ne.s32.totalorder %s159, %s162
      %p171 = scmp.eq.s32.totalorder %s21, 1
      %p172 = por %p170, %p171
      %p173 = scmp.ne.s32.totalorder %s162, %s163
      %p174 = scmp.eq.s32.totalorder %s21, 0
      %p175 = por %p173, %p174
      %p176 = scmp.ne.s32.totalorder %s162, %s163
      %p177 = scmp.eq.s32.totalorder %s22, 1
      %p178 = por %p176, %p177
      %p180 = scmp.ne.s32.totalorder %s163, %s179
      %p181 = scmp.eq.s32.totalorder %s22, 0
      %p182 = por %p180, %p181
      %s183 = ssub.s32 %s23, %s35
      %s184 = ssub.s32 %s24, %s31
      %s185 = sor.u32 %s183, %s184
      %p186 = scmp.eq.s32.totalorder %s185, 0
      %s188 = sadd.s32 %s187, 1
      %s189 = scalar_select %p186, %s187, %s188
      %p192 = pneg %p186
      %p193 = scmp.eq.s32.totalorder %s16, 1
      %p194 = por %p192, %p193
      %p195 = scmp.ne.s32.totalorder %s187, %s190
      %p196 = scmp.eq.s32.totalorder %s16, 0
      %p197 = por %p195, %p196
      %p198 = scmp.ne.s32.totalorder %s187, %s190
      %p199 = scmp.eq.s32.totalorder %s21, 1
      %p200 = por %p198, %p199
      %p201 = scmp.ne.s32.totalorder %s190, %s191
      %p202 = scmp.eq.s32.totalorder %s21, 0
      %p203 = por %p201, %p202
      %p204 = scmp.ne.s32.totalorder %s190, %s191
      %p205 = scmp.eq.s32.totalorder %s22, 1
      %p206 = por %p204, %p205
      %p208 = scmp.ne.s32.totalorder %s191, %s207
      %p209 = scmp.eq.s32.totalorder %s22, 0
      %p210 = por %p208, %p209
      %p211 = scmp.le.s32.totalorder 1, %s16
      %p212 = scmp.lt.s32.totalorder %s16, 3
      %p213 = pnand %p211, %p212
      %p214 = pneg %p213
      // Predicated region
      $region9: #{tpu_custom_call.1} parent=5 // pred_check
        _
      $region10: #{tpu_custom_call.1} parent=5 // pred_check_branch
        %216 = sbr.rel (%p213) target = $region12
      $region11: #{tpu_custom_call.1} parent=5 // pred_region
        %s217 = ssub.s32 %s16, 1
        // Predicated region
        $region13: #{tpu_custom_call.1} parent=11 // pred_check
          %p218 = pneg %p77
        $region14: #{tpu_custom_call.1} parent=11 // pred_check_branch
          %220 = sbr.rel (%p218) target = $region16
        $region15: #{tpu_custom_call.1} parent=11 // pred_region
          _
        $region16: #{tpu_custom_call.1} parent=11 // pred_fallthru
          _
        // Predicated region
        $region17: #{tpu_custom_call.1} parent=11 // pred_check
          %p221 = pneg %p98
        $region18: #{tpu_custom_call.1} parent=11 // pred_check_branch
          %223 = sbr.rel (%p221) target = $region20
        $region19: #{tpu_custom_call.1} parent=11 // pred_region
          _
        $region20: #{tpu_custom_call.1} parent=11 // pred_fallthru
          _
        // Predicated region
        $region21: #{tpu_custom_call.1} parent=11 // pred_check
          %p224 = pneg %p119
        $region22: #{tpu_custom_call.1} parent=11 // pred_check_branch
          %226 = sbr.rel (%p224) target = $region24
        $region23: #{tpu_custom_call.1} parent=11 // pred_region
          _
        $region24: #{tpu_custom_call.1} parent=11 // pred_fallthru
          _
      $region12: #{tpu_custom_call.1} parent=5 // pred_fallthru
        _
      %p227 = scmp.lt.s32.totalorder %s16, 2
      // Predicated region
      $region25: #{tpu_custom_call.1} parent=5 // pred_check
        %p228 = pneg %p227
      $region26: #{tpu_custom_call.1} parent=5 // pred_check_branch
        %230 = sbr.rel (%p228) target = $region28
      $region27: #{tpu_custom_call.1} parent=5 // pred_region
        // Predicated region
        $region29: #{tpu_custom_call.1} parent=27 // pred_check
          %p231 = pneg %p50
        $region30: #{tpu_custom_call.1} parent=27 // pred_check_branch
          %233 = sbr.rel (%p231) target = $region32
        $region31: #{tpu_custom_call.1} parent=27 // pred_region
          %s234 = smul.u32 16, %s24
          %p235 = scmp.lt.s32.totalorder %s23, 1
          %s236 = scalar_select %p235, %s23, 1
          %p237 = scmp.lt.s32.totalorder %s234, 15
          %s238 = scalar_select %p237, %s234, 15
          %s239 = smul.addr %s236, 16
          %s240 = sadd.s32 %s238, %s239
          %s241 = smul.addr %s240, 4
          %s242 = scalar_lea.vmem %s0, %s241
          %s243 = smul.u32 16, %s24
        $region32: #{tpu_custom_call.1} parent=27 // pred_fallthru
          _
      $region28: #{tpu_custom_call.1} parent=5 // pred_fallthru
        _
      %p244 = scmp.le.s32.totalorder 1, %s16
      %p245 = scmp.lt.s32.totalorder %s16, 3
      %p246 = pnand %p244, %p245
      %p247 = pneg %p246
      // Predicated region
      $region33: #{tpu_custom_call.1} parent=5 // pred_check
        _
      $region34: #{tpu_custom_call.1} parent=5 // pred_check_branch
        %249 = sbr.rel (%p246) target = $region36
      $region35: #{tpu_custom_call.1} parent=5 // pred_region
        %s250 = ssub.s32 %s16, 1
        %s251 = smul.u32 16, %s26
        %p252 = scmp.lt.s32.totalorder %s25, 1
        %s253 = scalar_select %p252, %s25, 1
        %p254 = scmp.lt.s32.totalorder %s251, 15
        %s255 = scalar_select %p254, %s251, 15
        %s256 = smul.addr %s253, 16
        %s257 = sadd.s32 %s255, %s256
        %s258 = smul.addr %s257, 4
        %s259 = scalar_lea.vmem %s0, %s258
        %p260 = pneg %p56
        %p261 = pneg %p53
        %p262 = pneg %p77
        %p263 = pneg %p74
        %p264 = pneg %p98
        %p265 = pneg %p95
        %p266 = pneg %p119
        %p267 = pneg %p116
        %p268 = pneg %p147
        %p269 = pneg %p144
        %s270 = sand.u32 %s134, 1
        %s271 = scalar_lea.sflag [#allocation3], %s270
        %s272 = sand.u32 %s134, 1
        %s273 = smul.addr %s272, 16
        %s274 = scalar_lea.vmem [#allocation2], %s273
        %p275 = pneg %p175
        %p276 = pneg %p172
        %p277 = scmp.lt.s32.totalorder %s25, 1
        %s278 = scalar_select %p277, %s25, 1
        %p279 = scmp.lt.s32.totalorder %s26, 0
        %s280 = scalar_select %p279, %s26, 0
        %s281 = smul.addr %s280, 2
        %s282 = smul.addr %s278, 2
        %s283 = sadd.s32 %s281, %s282
        %s284 = smul.addr %s283, 8
        %s285 = scalar_lea.vmem %s5, %s284
        %p286 = pneg %p203
        %p287 = pneg %p200
        %p288 = scmp.lt.s32.totalorder %s25, 1
        %s289 = scalar_select %p288, %s25, 1
        %p290 = scmp.lt.s32.totalorder %s26, 0
        %s291 = scalar_select %p290, %s26, 0
        %s292 = smul.addr %s291, 2
        %s293 = smul.addr %s289, 2
        %s294 = sadd.s32 %s292, %s293
        %s295 = smul.addr %s294, 8
        %s296 = scalar_lea.vmem %s6, %s295
        %s297 = smul.u32 16, %s26
        %p298 = scmp.lt.s32.totalorder %s25, 1
        %s299 = scalar_select %p298, %s25, 1
        %p300 = scmp.lt.s32.totalorder %s297, 15
        %s301 = scalar_select %p300, %s297, 15
        %s302 = smul.addr %s299, 16
        %s303 = sadd.s32 %s301, %s302
        %s304 = smul.addr %s303, 4
        %s305 = scalar_lea.vmem %s0, %s304
        %s306 = smul.u32 16, %s26
        %p307 = scmp.lt.s32.totalorder %s25, 1
        %s308 = scalar_select %p307, %s25, 1
        %p309 = scmp.lt.s32.totalorder %s26, 0
        %s310 = scalar_select %p309, %s26, 0
        %s311 = smul.addr %s310, 2
        %s312 = smul.addr %s308, 2
        %s313 = sadd.s32 %s311, %s312
        %s314 = smul.addr %s313, 8
        %s315 = scalar_lea.vmem %s5, %s314
        %p316 = scmp.lt.s32.totalorder %s25, 1
        %s317 = scalar_select %p316, %s25, 1
        %p318 = scmp.lt.s32.totalorder %s26, 0
        %s319 = scalar_select %p318, %s26, 0
        %s320 = smul.addr %s319, 2
        %s321 = smul.addr %s317, 2
        %s322 = sadd.s32 %s320, %s321
        %s323 = smul.addr %s322, 8
        %s324 = scalar_lea.vmem %s6, %s323
        %v326 = vld [vmem:[%s305] sm:$0xf]
        %v327 = vld [vmem:[%s305 + $0x4] sm:$0xf]
        %v328 = vld [vmem:[%s305 + $0x8] sm:$0xf]
        %v329 = vld [vmem:[%s305 + $0xc] sm:$0xf]
        %v330 = vld [vmem:[%s305 + $0x10] sm:$0xf]
        %v331 = vld [vmem:[%s305 + $0x14] sm:$0xf]
        %v332 = vld [vmem:[%s305 + $0x18] sm:$0xf]
        %v333 = vld [vmem:[%s305 + $0x1c] sm:$0xf]
        %v334 = vld [vmem:[%s305 + $0x20] sm:$0xf]
        %v335 = vld [vmem:[%s305 + $0x24] sm:$0xf]
        %v336 = vld [vmem:[%s305 + $0x28] sm:$0xf]
        %v337 = vld [vmem:[%s305 + $0x2c] sm:$0xf]
        %v338 = vld [vmem:[%s305 + $0x30] sm:$0xf]
        %v339 = vld [vmem:[%s305 + $0x34] sm:$0xf]
        %v340 = vld [vmem:[%s305 + $0x38] sm:$0xf]
        %v341 = vld [vmem:[%s305 + $0x3c] sm:$0xf]
        %v342 = vld [vmem:[%s1] sm:$0xf]
        %v359 = vunpack.c.l.b16 %v326
        %v360 = vunpack.c.l.b16 %v327
        %v361 = vunpack.c.l.b16 %v328
        %v362 = vunpack.c.l.b16 %v329
        %v363 = vunpack.c.l.b16 %v330
        %v364 = vunpack.c.l.b16 %v331
        %v365 = vunpack.c.l.b16 %v332
        %v366 = vunpack.c.l.b16 %v333
        %v367 = vunpack.c.l.b16 %v334
        %v368 = vunpack.c.l.b16 %v335
        %v369 = vunpack.c.l.b16 %v336
        %v370 = vunpack.c.l.b16 %v337
        %v371 = vunpack.c.l.b16 %v338
        %v372 = vunpack.c.l.b16 %v339
        %v373 = vunpack.c.l.b16 %v340
        %v374 = vunpack.c.l.b16 %v341
        %v375 = vpack.c.b16 %v360, %v359
        %v376 = vpack.c.b16 %v362, %v361
        %v377 = vpack.c.b16 %v364, %v363
        %v378 = vpack.c.b16 %v366, %v365
        %v379 = vpack.c.b16 %v368, %v367
        %v380 = vpack.c.b16 %v370, %v369
        %v381 = vpack.c.b16 %v372, %v371
        %v382 = vpack.c.b16 %v374, %v373
        %vm383 = vcmask 64512
        %v385 = vsel %vm383, %v375, 0
        %v388 = vsel %vm383, %v376, 0
        %v391 = vsel %vm383, %v377, 0
        %v394 = vsel %vm383, %v378, 0
        %v397 = vsel %vm383, %v379, 0
        %v400 = vsel %vm383, %v380, 0
        %v403 = vsel %vm383, %v381, 0
        %v406 = vsel %vm383, %v382, 0
        %vm408 = vcmask 1043456
        %v410 = vsel %vm408, %v342, 0
        %412 = vmatprep.subr.bf16.mxu0 0
        %413 = vmatpush1.bf16.msra.mxu0 %v410
        %414 = vmatprep.subr.bf16.mxu0 0
        %415 = vmatpush1.bf16.msra.mxu0 0
        %416 = vmatprep.subr.bf16.mxu0 0
        %417 = vmatpush1.bf16.msra.mxu0 0
        %418 = vmatprep.subr.bf16.mxu0 0
        %419 = vmatpush1.bf16.msra.mxu0 0
        %420 = vmatprep.subr.bf16.mxu0 0
        %421 = vmatpush1.bf16.msra.mxu0 0
        %422 = vmatprep.subr.bf16.mxu0 0
        %423 = vmatpush1.bf16.msra.mxu0 0
        %424 = vmatprep.subr.bf16.mxu0 0
        %425 = vmatpush1.bf16.msra.mxu0 0
        %426 = vmatprep.subr.bf16.mxu0 0
        %427 = vmatpush1.bf16.msra.mxu0 0
        %428 = vmatprep.subr.bf16.mxu0 0
        %429 = vmatpush1.bf16.msra.mxu0 0
        %430 = vmatprep.subr.bf16.mxu0 0
        %431 = vmatpush1.bf16.msra.mxu0 0
        %432 = vmatprep.subr.bf16.mxu0 0
        %433 = vmatpush1.bf16.msra.mxu0 0
        %434 = vmatprep.subr.bf16.mxu0 0
        %435 = vmatpush1.bf16.msra.mxu0 0
        %436 = vmatprep.subr.bf16.mxu0 0
        %437 = vmatpush1.bf16.msra.mxu0 0
        %438 = vmatprep.subr.bf16.mxu0 0
        %439 = vmatpush1.bf16.msra.mxu0 0
        %440 = vmatprep.subr.bf16.mxu0 0
        %441 = vmatpush1.bf16.msra.mxu0 0
        %442 = vmatprep.subr.bf16.mxu0 0
        %443 = vmatpush1.bf16.msra.mxu0 0
        %444 = vmatprep.mubr.bf16.mxu0 0
        %445 = vmatmul.mubr.bf16.gmra.mrb[0].mxu0 %v385
        %v446 = vpop.f32.mrb[0].mxu0
        %v447 = vadd.f32 0.0, %v446
        %v448 = vpop.f32.mrb[0].mxu0
        %v449 = vpop.f32.mrb[0].mxu0
        %v450 = vadd.f32 0.0, %v449
        %v451 = vpop.f32.mrb[0].mxu0
        %452 = vmatprep.mubr.bf16.mxu0 0
        %453 = vmatmul.mubr.bf16.gmra.mrb[0].mxu0 %v388
        %v454 = vpop.f32.mrb[0].mxu0
        %v455 = vadd.f32 0.0, %v454
        %v456 = vpop.f32.mrb[0].mxu0
        %v457 = vpop.f32.mrb[0].mxu0
        %v458 = vadd.f32 0.0, %v457
        %v459 = vpop.f32.mrb[0].mxu0
        %460 = vmatprep.mubr.bf16.mxu0 0
        %461 = vmatmul.mubr.bf16.gmra.mrb[0].mxu0 %v391
        %v462 = vpop.f32.mrb[0].mxu0
        %v463 = vadd.f32 0.0, %v462
        %v464 = vpop.f32.mrb[0].mxu0
        %v465 = vpop.f32.mrb[0].mxu0
        %v466 = vadd.f32 0.0, %v465
        %v467 = vpop.f32.mrb[0].mxu0
        %468 = vmatprep.mubr.bf16.mxu0 0
        %469 = vmatmul.mubr.bf16.gmra.mrb[0].mxu0 %v394
        %v470 = vpop.f32.mrb[0].mxu0
        %v471 = vadd.f32 0.0, %v470
        %v472 = vpop.f32.mrb[0].mxu0
        %v473 = vpop.f32.mrb[0].mxu0
        %v474 = vadd.f32 0.0, %v473
        %v475 = vpop.f32.mrb[0].mxu0
        %476 = vmatprep.mubr.bf16.mxu0 0
        %477 = vmatmul.mubr.bf16.gmra.mrb[0].mxu0 %v397
        %v478 = vpop.f32.mrb[0].mxu0
        %v479 = vadd.f32 0.0, %v478
        %v480 = vpop.f32.mrb[0].mxu0
        %v481 = vpop.f32.mrb[0].mxu0
        %v482 = vadd.f32 0.0, %v481
        %v483 = vpop.f32.mrb[0].mxu0
        %484 = vmatprep.mubr.bf16.mxu0 0
        %485 = vmatmul.mubr.bf16.gmra.mrb[0].mxu0 %v400
        %v486 = vpop.f32.mrb[0].mxu0
        %v487 = vadd.f32 0.0, %v486
        %v488 = vpop.f32.mrb[0].mxu0
        %v489 = vpop.f32.mrb[0].mxu0
        %v490 = vadd.f32 0.0, %v489
        %v491 = vpop.f32.mrb[0].mxu0
        %492 = vmatprep.mubr.bf16.mxu0 0
        %493 = vmatmul.mubr.bf16.gmra.mrb[0].mxu0 %v403
        %v494 = vpop.f32.mrb[0].mxu0
        %v495 = vadd.f32 0.0, %v494
        %v496 = vpop.f32.mrb[0].mxu0
        %v497 = vpop.f32.mrb[0].mxu0
        %v498 = vadd.f32 0.0, %v497
        %v499 = vpop.f32.mrb[0].mxu0
        %500 = vmatprep.mubr.bf16.mxu0 0
        %501 = vmatmul.mubr.bf16.gmra.mrb[0].mxu0 %v406
        %v502 = vpop.f32.mrb[0].mxu0
        %v503 = vadd.f32 0.0, %v502
        %v504 = vpop.f32.mrb[0].mxu0
        %v505 = vpop.f32.mrb[0].mxu0
        %v506 = vadd.f32 0.0, %v505
        %v507 = vpop.f32.mrb[0].mxu0
        %508 = vdwg.mxu0
        %v509 = vsel %vm383, %v447, -inf
        %v510 = vrot.slane %v509, 4
        %v511 = vmax.f32 %v509, %v510
        %v512 = vrot.slane %v511, 2
        %v513 = vmax.f32 %v511, %v512
        %v514 = vrot.slane %v513, 1
        %v515 = vmax.f32 %v513, %v514
        %v516 = vsel %vm383, %v450, -inf
        %v517 = vrot.slane %v516, 4
        %v518 = vmax.f32 %v516, %v517
        %v519 = vrot.slane %v518, 2
        %v520 = vmax.f32 %v518, %v519
        %v521 = vrot.slane %v520, 1
        %v522 = vmax.f32 %v520, %v521
        %v523 = vsel %vm383, %v455, -inf
        %v524 = vrot.slane %v523, 4
        %v525 = vmax.f32 %v523, %v524
        %v526 = vrot.slane %v525, 2
        %v527 = vmax.f32 %v525, %v526
        %v528 = vrot.slane %v527, 1
        %v529 = vmax.f32 %v527, %v528
        %v530 = vsel %vm383, %v458, -inf
        %v531 = vrot.slane %v530, 4
        %v532 = vmax.f32 %v530, %v531
        %v533 = vrot.slane %v532, 2
        %v534 = vmax.f32 %v532, %v533
        %v535 = vrot.slane %v534, 1
        %v536 = vmax.f32 %v534, %v535
        %v537 = vsel %vm383, %v463, -inf
        %v538 = vrot.slane %v537, 4
        %v539 = vmax.f32 %v537, %v538
        %v540 = vrot.slane %v539, 2
        %v541 = vmax.f32 %v539, %v540
        %v542 = vrot.slane %v541, 1
        %v543 = vmax.f32 %v541, %v542
        %v544 = vsel %vm383, %v466, -inf
        %v545 = vrot.slane %v544, 4
        %v546 = vmax.f32 %v544, %v545
        %v547 = vrot.slane %v546, 2
        %v548 = vmax.f32 %v546, %v547
        %v549 = vrot.slane %v548, 1
        %v550 = vmax.f32 %v548, %v549
        %v551 = vsel %vm383, %v471, -inf
        %v552 = vrot.slane %v551, 4
        %v553 = vmax.f32 %v551, %v552
        %v554 = vrot.slane %v553, 2
        %v555 = vmax.f32 %v553, %v554
        %v556 = vrot.slane %v555, 1
        %v557 = vmax.f32 %v555, %v556
        %v558 = vsel %vm383, %v474, -inf
        %v559 = vrot.slane %v558, 4
        %v560 = vmax.f32 %v558, %v559
        %v561 = vrot.slane %v560, 2
        %v562 = vmax.f32 %v560, %v561
        %v563 = vrot.slane %v562, 1
        %v564 = vmax.f32 %v562, %v563
        %v565 = vsel %vm383, %v479, -inf
        %v566 = vrot.slane %v565, 4
        %v567 = vmax.f32 %v565, %v566
        %v568 = vrot.slane %v567, 2
        %v569 = vmax.f32 %v567, %v568
        %v570 = vrot.slane %v569, 1
        %v571 = vmax.f32 %v569, %v570
        %v572 = vsel %vm383, %v482, -inf
        %v573 = vrot.slane %v572, 4
        %v574 = vmax.f32 %v572, %v573
        %v575 = vrot.slane %v574, 2
        %v576 = vmax.f32 %v574, %v575
        %v577 = vrot.slane %v576, 1
        %v578 = vmax.f32 %v576, %v577
        %v579 = vsel %vm383, %v487, -inf
        %v580 = vrot.slane %v579, 4
        %v581 = vmax.f32 %v579, %v580
        %v582 = vrot.slane %v581, 2
        %v583 = vmax.f32 %v581, %v582
        %v584 = vrot.slane %v583, 1
        %v585 = vmax.f32 %v583, %v584
        %v586 = vsel %vm383, %v490, -inf
        %v587 = vrot.slane %v586, 4
        %v588 = vmax.f32 %v586, %v587
        %v589 = vrot.slane %v588, 2
        %v590 = vmax.f32 %v588, %v589
        %v591 = vrot.slane %v590, 1
        %v592 = vmax.f32 %v590, %v591
        %v593 = vsel %vm383, %v495, -inf
        %v594 = vrot.slane %v593, 4
        %v595 = vmax.f32 %v593, %v594
        %v596 = vrot.slane %v595, 2
        %v597 = vmax.f32 %v595, %v596
        %v598 = vrot.slane %v597, 1
        %v599 = vmax.f32 %v597, %v598
        %v600 = vsel %vm383, %v498, -inf
        %v601 = vrot.slane %v600, 4
        %v602 = vmax.f32 %v600, %v601
        %v603 = vrot.slane %v602, 2
        %v604 = vmax.f32 %v602, %v603
        %v605 = vrot.slane %v604, 1
        %v606 = vmax.f32 %v604, %v605
        %v607 = vsel %vm383, %v503, -inf
        %v608 = vrot.slane %v607, 4
        %v609 = vmax.f32 %v607, %v608
        %v610 = vrot.slane %v609, 2
        %v611 = vmax.f32 %v609, %v610
        %v612 = vrot.slane %v611, 1
        %v613 = vmax.f32 %v611, %v612
        %v614 = vsel %vm383, %v506, -inf
        %v615 = vrot.slane %v614, 4
        %v616 = vmax.f32 %v614, %v615
        %v617 = vrot.slane %v616, 2
        %v618 = vmax.f32 %v616, %v617
        %v619 = vrot.slane %v618, 1
        %v620 = vmax.f32 %v618, %v619
        %v621 = vsub.f32 %v447, %v515
        %v622 = vsub.f32 %v450, %v522
        %v623 = vsub.f32 %v455, %v529
        %v624 = vsub.f32 %v458, %v536
        %v625 = vsub.f32 %v463, %v543
        %v626 = vsub.f32 %v466, %v550
        %v627 = vsub.f32 %v471, %v557
        %v628 = vsub.f32 %v474, %v564
        %v629 = vsub.f32 %v479, %v571
        %v630 = vsub.f32 %v482, %v578
        %v631 = vsub.f32 %v487, %v585
        %v632 = vsub.f32 %v490, %v592
        %v633 = vsub.f32 %v495, %v599
        %v634 = vsub.f32 %v498, %v606
        %v635 = vsub.f32 %v503, %v613
        %v636 = vsub.f32 %v506, %v620
        %v637 = vmul.f32 %v621, 1.442695
        %v638 = vpow.pop %v637
        %v639 = vmul.f32 %v622, 1.442695
        %v640 = vpow.pop %v639
        %v641 = vmul.f32 %v623, 1.442695
        %v642 = vpow.pop %v641
        %v643 = vmul.f32 %v624, 1.442695
        %v644 = vpow.pop %v643
        %v645 = vmul.f32 %v625, 1.442695
        %v646 = vpow.pop %v645
        %v647 = vmul.f32 %v626, 1.442695
        %v648 = vpow.pop %v647
        %v649 = vmul.f32 %v627, 1.442695
        %v650 = vpow.pop %v649
        %v651 = vmul.f32 %v628, 1.442695
        %v652 = vpow.pop %v651
        %v653 = vmul.f32 %v629, 1.442695
        %v654 = vpow.pop %v653
        %v655 = vmul.f32 %v630, 1.442695
        %v656 = vpow.pop %v655
        %v657 = vmul.f32 %v631, 1.442695
        %v658 = vpow.pop %v657
        %v659 = vmul.f32 %v632, 1.442695
        %v660 = vpow.pop %v659
        %v661 = vmul.f32 %v633, 1.442695
        %v662 = vpow.pop %v661
        %v663 = vmul.f32 %v634, 1.442695
        %v664 = vpow.pop %v663
        %v665 = vmul.f32 %v635, 1.442695
        %v666 = vpow.pop %v665
        %v667 = vmul.f32 %v636, 1.442695
        %v668 = vpow.pop %v667
        %v669 = vsel %vm383, %v638, 0.0
        %v670 = vrot.slane %v669, 4
        %v671 = vadd.f32 %v669, %v670
        %v672 = vrot.slane %v671, 2
        %v673 = vadd.f32 %v671, %v672
        %v674 = vrot.slane %v673, 1
        %v675 = vadd.f32 %v673, %v674
        %v676 = vsel %vm383, %v640, 0.0
        %v677 = vrot.slane %v676, 4
        %v678 = vadd.f32 %v676, %v677
        %v679 = vrot.slane %v678, 2
        %v680 = vadd.f32 %v678, %v679
        %v681 = vrot.slane %v680, 1
        %v682 = vadd.f32 %v680, %v681
        %v683 = vsel %vm383, %v642, 0.0
        %v684 = vrot.slane %v683, 4
        %v685 = vadd.f32 %v683, %v684
        %v686 = vrot.slane %v685, 2
        %v687 = vadd.f32 %v685, %v686
        %v688 = vrot.slane %v687, 1
        %v689 = vadd.f32 %v687, %v688
        %v690 = vsel %vm383, %v644, 0.0
        %v691 = vrot.slane %v690, 4
        %v692 = vadd.f32 %v690, %v691
        %v693 = vrot.slane %v692, 2
        %v694 = vadd.f32 %v692, %v693
        %v695 = vrot.slane %v694, 1
        %v696 = vadd.f32 %v694, %v695
        %v697 = vsel %vm383, %v646, 0.0
        %v698 = vrot.slane %v697, 4
        %v699 = vadd.f32 %v697, %v698
        %v700 = vrot.slane %v699, 2
        %v701 = vadd.f32 %v699, %v700
        %v702 = vrot.slane %v701, 1
        %v703 = vadd.f32 %v701, %v702
        %v704 = vsel %vm383, %v648, 0.0
        %v705 = vrot.slane %v704, 4
        %v706 = vadd.f32 %v704, %v705
        %v707 = vrot.slane %v706, 2
        %v708 = vadd.f32 %v706, %v707
        %v709 = vrot.slane %v708, 1
        %v710 = vadd.f32 %v708, %v709
        %v711 = vsel %vm383, %v650, 0.0
        %v712 = vrot.slane %v711, 4
        %v713 = vadd.f32 %v711, %v712
        %v714 = vrot.slane %v713, 2
        %v715 = vadd.f32 %v713, %v714
        %v716 = vrot.slane %v715, 1
        %v717 = vadd.f32 %v715, %v716
        %v718 = vsel %vm383, %v652, 0.0
        %v719 = vrot.slane %v718, 4
        %v720 = vadd.f32 %v718, %v719
        %v721 = vrot.slane %v720, 2
        %v722 = vadd.f32 %v720, %v721
        %v723 = vrot.slane %v722, 1
        %v724 = vadd.f32 %v722, %v723
        %v725 = vsel %vm383, %v654, 0.0
        %v726 = vrot.slane %v725, 4
        %v727 = vadd.f32 %v725, %v726
        %v728 = vrot.slane %v727, 2
        %v729 = vadd.f32 %v727, %v728
        %v730 = vrot.slane %v729, 1
        %v731 = vadd.f32 %v729, %v730
        %v732 = vsel %vm383, %v656, 0.0
        %v733 = vrot.slane %v732, 4
        %v734 = vadd.f32 %v732, %v733
        %v735 = vrot.slane %v734, 2
        %v736 = vadd.f32 %v734, %v735
        %v737 = vrot.slane %v736, 1
        %v738 = vadd.f32 %v736, %v737
        %v739 = vsel %vm383, %v658, 0.0
        %v740 = vrot.slane %v739, 4
        %v741 = vadd.f32 %v739, %v740
        %v742 = vrot.slane %v741, 2
        %v743 = vadd.f32 %v741, %v742
        %v744 = vrot.slane %v743, 1
        %v745 = vadd.f32 %v743, %v744
        %v746 = vsel %vm383, %v660, 0.0
        %v747 = vrot.slane %v746, 4
        %v748 = vadd.f32 %v746, %v747
        %v749 = vrot.slane %v748, 2
        %v750 = vadd.f32 %v748, %v749
        %v751 = vrot.slane %v750, 1
        %v752 = vadd.f32 %v750, %v751
        %v753 = vsel %vm383, %v662, 0.0
        %v754 = vrot.slane %v753, 4
        %v755 = vadd.f32 %v753, %v754
        %v756 = vrot.slane %v755, 2
        %v757 = vadd.f32 %v755, %v756
        %v758 = vrot.slane %v757, 1
        %v759 = vadd.f32 %v757, %v758
        %v760 = vsel %vm383, %v664, 0.0
        %v761 = vrot.slane %v760, 4
        %v762 = vadd.f32 %v760, %v761
        %v763 = vrot.slane %v762, 2
        %v764 = vadd.f32 %v762, %v763
        %v765 = vrot.slane %v764, 1
        %v766 = vadd.f32 %v764, %v765
        %v767 = vsel %vm383, %v666, 0.0
        %v768 = vrot.slane %v767, 4
        %v769 = vadd.f32 %v767, %v768
        %v770 = vrot.slane %v769, 2
        %v771 = vadd.f32 %v769, %v770
        %v772 = vrot.slane %v771, 1
        %v773 = vadd.f32 %v771, %v772
        %v774 = vsel %vm383, %v668, 0.0
        %v775 = vrot.slane %v774, 4
        %v776 = vadd.f32 %v774, %v775
        %v777 = vrot.slane %v776, 2
        %v778 = vadd.f32 %v776, %v777
        %v779 = vrot.slane %v778, 1
        %v780 = vadd.f32 %v778, %v779
        %v781 = vunpack.c.l.bf16 %v326
        %v782 = vunpack.c.l.bf16 %v327
        %v783 = vunpack.c.l.bf16 %v328
        %v784 = vunpack.c.l.bf16 %v329
        %v785 = vunpack.c.l.bf16 %v330
        %v786 = vunpack.c.l.bf16 %v331
        %v787 = vunpack.c.l.bf16 %v332
        %v788 = vunpack.c.l.bf16 %v333
        %v789 = vunpack.c.l.bf16 %v334
        %v790 = vunpack.c.l.bf16 %v335
        %v791 = vunpack.c.l.bf16 %v336
        %v792 = vunpack.c.l.bf16 %v337
        %v793 = vunpack.c.l.bf16 %v338
        %v794 = vunpack.c.l.bf16 %v339
        %v795 = vunpack.c.l.bf16 %v340
        %v796 = vunpack.c.l.bf16 %v341
        %v797 = vmul.f32 %v638, %v781
        %v798 = vmul.f32 %v640, %v782
        %v799 = vmul.f32 %v642, %v783
        %v800 = vmul.f32 %v644, %v784
        %v801 = vmul.f32 %v646, %v785
        %v802 = vmul.f32 %v648, %v786
        %v803 = vmul.f32 %v650, %v787
        %v804 = vmul.f32 %v652, %v788
        %v805 = vmul.f32 %v654, %v789
        %v806 = vmul.f32 %v656, %v790
        %v807 = vmul.f32 %v658, %v791
        %v808 = vmul.f32 %v660, %v792
        %v809 = vmul.f32 %v662, %v793
        %v810 = vmul.f32 %v664, %v794
        %v811 = vmul.f32 %v666, %v795
        %v812 = vmul.f32 %v668, %v796
        %v813 = vsel %vm383, %v797, 0.0
        %v814 = vrot.slane %v813, 4
        %v815 = vadd.f32 %v813, %v814
        %v816 = vrot.slane %v815, 2
        %v817 = vadd.f32 %v815, %v816
        %v818 = vrot.slane %v817, 1
        %v819 = vadd.f32 %v817, %v818
        %v820 = vsel %vm383, %v798, 0.0
        %v821 = vrot.slane %v820, 4
        %v822 = vadd.f32 %v820, %v821
        %v823 = vrot.slane %v822, 2
        %v824 = vadd.f32 %v822, %v823
        %v825 = vrot.slane %v824, 1
        %v826 = vadd.f32 %v824, %v825
        %v827 = vsel %vm383, %v799, 0.0
        %v828 = vrot.slane %v827, 4
        %v829 = vadd.f32 %v827, %v828
        %v830 = vrot.slane %v829, 2
        %v831 = vadd.f32 %v829, %v830
        %v832 = vrot.slane %v831, 1
        %v833 = vadd.f32 %v831, %v832
        %v834 = vsel %vm383, %v800, 0.0
        %v835 = vrot.slane %v834, 4
        %v836 = vadd.f32 %v834, %v835
        %v837 = vrot.slane %v836, 2
        %v838 = vadd.f32 %v836, %v837
        %v839 = vrot.slane %v838, 1
        %v840 = vadd.f32 %v838, %v839
        %v841 = vsel %vm383, %v801, 0.0
        %v842 = vrot.slane %v841, 4
        %v843 = vadd.f32 %v841, %v842
        %v844 = vrot.slane %v843, 2
        %v845 = vadd.f32 %v843, %v844
        %v846 = vrot.slane %v845, 1
        %v847 = vadd.f32 %v845, %v846
        %v848 = vsel %vm383, %v802, 0.0
        %v849 = vrot.slane %v848, 4
        %v850 = vadd.f32 %v848, %v849
        %v851 = vrot.slane %v850, 2
        %v852 = vadd.f32 %v850, %v851
        %v853 = vrot.slane %v852, 1
        %v854 = vadd.f32 %v852, %v853
        %v855 = vsel %vm383, %v803, 0.0
        %v856 = vrot.slane %v855, 4
        %v857 = vadd.f32 %v855, %v856
        %v858 = vrot.slane %v857, 2
        %v859 = vadd.f32 %v857, %v858
        %v860 = vrot.slane %v859, 1
        %v861 = vadd.f32 %v859, %v860
        %v862 = vsel %vm383, %v804, 0.0
        %v863 = vrot.slane %v862, 4
        %v864 = vadd.f32 %v862, %v863
        %v865 = vrot.slane %v864, 2
        %v866 = vadd.f32 %v864, %v865
        %v867 = vrot.slane %v866, 1
        %v868 = vadd.f32 %v866, %v867
        %v869 = vsel %vm383, %v805, 0.0
        %v870 = vrot.slane %v869, 4
        %v871 = vadd.f32 %v869, %v870
        %v872 = vrot.slane %v871, 2
        %v873 = vadd.f32 %v871, %v872
        %v874 = vrot.slane %v873, 1
        %v875 = vadd.f32 %v873, %v874
        %v876 = vsel %vm383, %v806, 0.0
        %v877 = vrot.slane %v876, 4
        %v878 = vadd.f32 %v876, %v877
        %v879 = vrot.slane %v878, 2
        %v880 = vadd.f32 %v878, %v879
        %v881 = vrot.slane %v880, 1
        %v882 = vadd.f32 %v880, %v881
        %v883 = vsel %vm383, %v807, 0.0
        %v884 = vrot.slane %v883, 4
        %v885 = vadd.f32 %v883, %v884
        %v886 = vrot.slane %v885, 2
        %v887 = vadd.f32 %v885, %v886
        %v888 = vrot.slane %v887, 1
        %v889 = vadd.f32 %v887, %v888
        %v890 = vsel %vm383, %v808, 0.0
        %v891 = vrot.slane %v890, 4
        %v892 = vadd.f32 %v890, %v891
        %v893 = vrot.slane %v892, 2
        %v894 = vadd.f32 %v892, %v893
        %v895 = vrot.slane %v894, 1
        %v896 = vadd.f32 %v894, %v895
        %v897 = vsel %vm383, %v809, 0.0
        %v898 = vrot.slane %v897, 4
        %v899 = vadd.f32 %v897, %v898
        %v900 = vrot.slane %v899, 2
        %v901 = vadd.f32 %v899, %v900
        %v902 = vrot.slane %v901, 1
        %v903 = vadd.f32 %v901, %v902
        %v904 = vsel %vm383, %v810, 0.0
        %v905 = vrot.slane %v904, 4
        %v906 = vadd.f32 %v904, %v905
        %v907 = vrot.slane %v906, 2
        %v908 = vadd.f32 %v906, %v907
        %v909 = vrot.slane %v908, 1
        %v910 = vadd.f32 %v908, %v909
        %v911 = vsel %vm383, %v811, 0.0
        %v912 = vrot.slane %v911, 4
        %v913 = vadd.f32 %v911, %v912
        %v914 = vrot.slane %v913, 2
        %v915 = vadd.f32 %v913, %v914
        %v916 = vrot.slane %v915, 1
        %v917 = vadd.f32 %v915, %v916
        %v918 = vsel %vm383, %v812, 0.0
        %v919 = vrot.slane %v918, 4
        %v920 = vadd.f32 %v918, %v919
        %v921 = vrot.slane %v920, 2
        %v922 = vadd.f32 %v920, %v921
        %v923 = vrot.slane %v922, 1
        %v924 = vadd.f32 %v922, %v923
        %v925 = vrcp.pop %v675
        %v926 = vmul.f32 %v819, %v925
        %v927 = vrcp.pop %v682
        %v928 = vmul.f32 %v826, %v927
        %v929 = vrcp.pop %v689
        %v930 = vmul.f32 %v833, %v929
        %v931 = vrcp.pop %v696
        %v932 = vmul.f32 %v840, %v931
        %v933 = vrcp.pop %v703
        %v934 = vmul.f32 %v847, %v933
        %v935 = vrcp.pop %v710
        %v936 = vmul.f32 %v854, %v935
        %v937 = vrcp.pop %v717
        %v938 = vmul.f32 %v861, %v937
        %v939 = vrcp.pop %v724
        %v940 = vmul.f32 %v868, %v939
        %v941 = vrcp.pop %v731
        %v942 = vmul.f32 %v875, %v941
        %v943 = vrcp.pop %v738
        %v944 = vmul.f32 %v882, %v943
        %v945 = vrcp.pop %v745
        %v946 = vmul.f32 %v889, %v945
        %v947 = vrcp.pop %v752
        %v948 = vmul.f32 %v896, %v947
        %v949 = vrcp.pop %v759
        %v950 = vmul.f32 %v903, %v949
        %v951 = vrcp.pop %v766
        %v952 = vmul.f32 %v910, %v951
        %v953 = vrcp.pop %v773
        %v954 = vmul.f32 %v917, %v953
        %v955 = vrcp.pop %v780
        %v956 = vmul.f32 %v924, %v955
        %v957 = vld [vmem:[%s2] sm:$0xff]
        %v958 = vld [vmem:[%s2 + $0x8] sm:$0xff]
        %v959 = vld [vmem:[%s3] sm:$0xff]
        %v960 = vld [vmem:[%s3 + $0x8] sm:$0xff]
        %962 = vset.pattern.permute.xlu0 0
        %963 = vperm.xlu0 %962, %v959
        %v964 = vpop.permute.xlu0 %963
        %967 = vset.pattern.permute.xlu0 0
        %968 = vperm.xlu0 %967, %v960
        %v969 = vpop.permute.xlu0 %968
        %vm987 = vcmask 1041409
        %v988 = vsel %vm987, %v928, %v926
        %vm989 = vcmask 1042434
        %v990 = vsel %vm989, %v930, %v988
        %vm991 = vcmask 1043459
        %v992 = vsel %vm991, %v932, %v990
        %vm993 = vcmask 1044484
        %v994 = vsel %vm993, %v934, %v992
        %vm995 = vcmask 1045509
        %v996 = vsel %vm995, %v936, %v994
        %vm997 = vcmask 1046534
        %v998 = vsel %vm997, %v938, %v996
        %vm999 = vcmask 1047559
        %v1000 = vsel %vm999, %v940, %v998
        %v1001 = vsel %vm987, %v944, %v942
        %v1002 = vsel %vm989, %v946, %v1001
        %v1003 = vsel %vm991, %v948, %v1002
        %v1004 = vsel %vm993, %v950, %v1003
        %v1005 = vsel %vm995, %v952, %v1004
        %v1006 = vsel %vm997, %v954, %v1005
        %v1007 = vsel %vm999, %v956, %v1006
        %v1009 = vsel %vm383, %v957, 0
        %v1012 = vsel %vm383, %v958, 0
        %v1014 = vsel %vm383, %v1000, 0
        %v1016 = vsel %vm383, %v1007, 0
        %1018 = vmatprep.subr.mxu0 0.0
        %1019 = vmatpush1.xpose.msra.mxu0 %v1014
        %1020 = vmatprep.subr.mxu0 0.0
        %1021 = vmatpush1.xpose.msra.mxu0 %v1016
        %1022 = vmatprep.subr.mxu0 0.0
        %1023 = vmatpush1.xpose.msra.mxu0 0.0
        %1024 = vmatprep.subr.mxu0 0.0
        %1025 = vmatpush1.xpose.msra.mxu0 0.0
        %1026 = vmatprep.subr.mxu0 0.0
        %1027 = vmatpush1.xpose.msra.mxu0 0.0
        %1028 = vmatprep.subr.mxu0 0.0
        %1029 = vmatpush1.xpose.msra.mxu0 0.0
        %1030 = vmatprep.subr.mxu0 0.0
        %1031 = vmatpush1.xpose.msra.mxu0 0.0
        %1032 = vmatprep.subr.mxu0 0.0
        %1033 = vmatpush1.xpose.msra.mxu0 0.0
        %1034 = vmatprep.subr.mxu0 0.0
        %1035 = vmatpush1.xpose.msra.mxu0 0.0
        %1036 = vmatprep.subr.mxu0 0.0
        %1037 = vmatpush1.xpose.msra.mxu0 0.0
        %1038 = vmatprep.subr.mxu0 0.0
        %1039 = vmatpush1.xpose.msra.mxu0 0.0
        %1040 = vmatprep.subr.mxu0 0.0
        %1041 = vmatpush1.xpose.msra.mxu0 0.0
        %1042 = vmatprep.subr.mxu0 0.0
        %1043 = vmatpush1.xpose.msra.mxu0 0.0
        %1044 = vmatprep.subr.mxu0 0.0
        %1045 = vmatpush1.xpose.msra.mxu0 0.0
        %1046 = vmatprep.subr.mxu0 0.0
        %1047 = vmatpush1.xpose.msra.mxu0 0.0
        %1048 = vmatprep.subr.mxu0 0.0
        %1049 = vmatpush1.xpose.msra.mxu0 0.0
        %1050 = vmatprep.subr.mxu0 0.0
        %1051 = vmatpush1.xpose.msra.mxu0 0.0
        %1052 = vmatprep.subr.mxu0 0.0
        %1053 = vmatpush1.xpose.msra.mxu0 0.0
        %1054 = vmatprep.subr.mxu0 0.0
        %1055 = vmatpush1.xpose.msra.mxu0 0.0
        %1056 = vmatprep.subr.mxu0 0.0
        %1057 = vmatpush1.xpose.msra.mxu0 0.0
        %1058 = vmatprep.subr.mxu0 0.0
        %1059 = vmatpush1.xpose.msra.mxu0 0.0
        %1060 = vmatprep.subr.mxu0 0.0
        %1061 = vmatpush1.xpose.msra.mxu0 0.0
        %1062 = vmatprep.subr.mxu0 0.0
        %1063 = vmatpush1.xpose.msra.mxu0 0.0
        %1064 = vmatprep.subr.mxu0 0.0
        %1065 = vmatpush1.xpose.msra.mxu0 0.0
        %1066 = vmatprep.subr.mxu0 0.0
        %1067 = vmatpush1.xpose.msra.mxu0 0.0
        %1068 = vmatprep.subr.mxu0 0.0
        %1069 = vmatpush1.xpose.msra.mxu0 0.0
        %1070 = vmatprep.subr.mxu0 0.0
        %1071 = vmatpush1.xpose.msra.mxu0 0.0
        %1072 = vmatprep.subr.mxu0 0.0
        %1073 = vmatpush1.xpose.msra.mxu0 0.0
        %1074 = vmatprep.subr.mxu0 0.0
        %1075 = vmatpush1.xpose.msra.mxu0 0.0
        %1076 = vmatprep.subr.mxu0 0.0
        %1077 = vmatpush1.xpose.msra.mxu0 0.0
        %1078 = vmatprep.subr.mxu0 0.0
        %1079 = vmatpush1.xpose.msra.mxu0 0.0
        %1080 = vmatprep.subr.mxu0 0.0
        %1081 = vmatpush1.xpose.msra.mxu0 0.0
        %1082 = vmatprep.mubr.f32.mxu0 0.0
        %1083 = vmatmul.mubr.f32.gmra.mrb[0].mxu0 %v1009
        %v1084 = vpop.f32.mrb[0].mxu0
        %v1085 = vadd.f32 %v964, %v1084
        %v1086 = vpop.f32.mrb[0].mxu0
        %1087 = vmatprep.mubr.f32.mxu0 0.0
        %1088 = vmatmul.mubr.f32.gmra.mrb[0].mxu0 %v1012
        %v1089 = vpop.f32.mrb[0].mxu0
        %v1090 = vadd.f32 %v969, %v1089
        %v1091 = vpop.f32.mrb[0].mxu0
        %1092 = vdwg.mxu0
        %vm1093 = vcmask 130048
        %1094 = vst.msk [vmem:[%s274] sm:$0xff] %vm1093, %v1085
        %1095 = vst.msk [vmem:[%s274 + $0x8] sm:$0xff] %vm1093, %v1090
        %v1096 = vsel %vm1093, %v1085, 0.0
        %1097 = vadd.xlane.f32.xlu0 %v1096
        %v1098 = vpop.xlane.xlu0 %1097
        %v1099 = vsel %vm1093, %v1090, 0.0
        %1100 = vadd.xlane.f32.xlu0 %v1099
        %v1101 = vpop.xlane.xlu0 %1100
        %vm1102 = vcmask 7168
        %1103 = vst.msk [vmem:[%s315] sm:$0xff] %vm1102, %v1098
        %1104 = vst.msk [vmem:[%s315 + $0x8] sm:$0xff] %vm1102, %v1101
        %v1105 = vmul.f32 %v1085, %v1085
        %v1106 = vmul.f32 %v1090, %v1090
        %v1107 = vsel %vm1093, %v1105, 0.0
        %1108 = vadd.xlane.f32.xlu0 %v1107
        %v1109 = vpop.xlane.xlu0 %1108
        %v1110 = vsel %vm1093, %v1106, 0.0
        %1111 = vadd.xlane.f32.xlu0 %v1110
        %v1112 = vpop.xlane.xlu0 %1111
        %1113 = vst.msk [vmem:[%s324] sm:$0xff] %vm1102, %v1109
        %1114 = vst.msk [vmem:[%s324 + $0x8] sm:$0xff] %vm1102, %v1112
        %s1115 = sand.u32 %s134, 1
        %s1116 = scalar_lea.sflag [#allocation3], %s1115
        %s1117 = sand.u32 %s134, 1
        %s1118 = smul.addr %s1117, 16
        %s1119 = scalar_lea.vmem [#allocation2], %s1118
        %p1120 = scmp.lt.s32.totalorder %s25, 1
        %s1121 = scalar_select %p1120, %s25, 1
        %p1122 = scmp.lt.s32.totalorder %s26, 0
        %s1123 = scalar_select %p1122, %s26, 0
        %s1124 = smul.addr %s1123, 2
        %s1125 = smul.addr %s1121, 2
        %s1126 = sadd.s32 %s1124, %s1125
        %s1127 = smul.addr %s1126, 8
        %s1128 = scalar_lea.vmem %s5, %s1127
        %p1129 = scmp.lt.s32.totalorder %s25, 1
        %s1130 = scalar_select %p1129, %s25, 1
        %p1131 = scmp.lt.s32.totalorder %s26, 0
        %s1132 = scalar_select %p1131, %s26, 0
        %s1133 = smul.addr %s1132, 2
        %s1134 = smul.addr %s1130, 2
        %s1135 = sadd.s32 %s1133, %s1134
        %s1136 = smul.addr %s1135, 8
        %s1137 = scalar_lea.vmem %s6, %s1136
        // Predicated region
        $region37: #{tpu_custom_call.1} parent=35 // pred_check
          %p1138 = pneg %p144
        $region38: #{tpu_custom_call.1} parent=35 // pred_check_branch
          %1140 = sbr.rel (%p1138) target = $region40
        $region39: #{tpu_custom_call.1} parent=35 // pred_region
          %s1142 = ssub.s32 256, 256
          %1143 = vsyncadd %s1116, %s1142
          %s1144 = smul.addr %s25, 2
          %s1145 = sadd.s32 %s26, %s1144
          %s1146 = smul.addr %s1145, 128
          %s1147 = scalar_lea.hbm %s4, %s1146
          %s1148 = sshll.u32 %s1119, 4
          %s1149 = int_to_ptr.vmem [resolvable:$true] %s1148
          %1154 = dma.vmem_to_hbm [thread:$0]  %s1149, 256, %s1147, %s1116, 128, 128, 8
        $region40: #{tpu_custom_call.1} parent=35 // pred_fallthru
          _
        // Predicated region
        $region41: #{tpu_custom_call.1} parent=35 // pred_check
          %p1155 = pneg %p172
        $region42: #{tpu_custom_call.1} parent=35 // pred_check_branch
          %1157 = sbr.rel (%p1155) target = $region44
        $region43: #{tpu_custom_call.1} parent=35 // pred_region
          _
        $region44: #{tpu_custom_call.1} parent=35 // pred_fallthru
          _
        // Predicated region
        $region45: #{tpu_custom_call.1} parent=35 // pred_check
          %p1158 = pneg %p200
        $region46: #{tpu_custom_call.1} parent=35 // pred_check_branch
          %1160 = sbr.rel (%p1158) target = $region48
        $region47: #{tpu_custom_call.1} parent=35 // pred_region
          _
        $region48: #{tpu_custom_call.1} parent=35 // pred_fallthru
          _
      $region36: #{tpu_custom_call.1} parent=5 // pred_fallthru
        _
      %p1161 = scmp.le.s32.totalorder 2, %s16
      // Predicated region
      $region49: #{tpu_custom_call.1} parent=5 // pred_check
        %p1162 = pneg %p1161
      $region50: #{tpu_custom_call.1} parent=5 // pred_check_branch
        %1164 = sbr.rel (%p1162) target = $region52
      $region51: #{tpu_custom_call.1} parent=5 // pred_region
        %s1165 = ssub.s32 %s16, 2
        // Predicated region
        $region53: #{tpu_custom_call.1} parent=51 // pred_check
          %p1166 = pneg %p150
        $region54: #{tpu_custom_call.1} parent=51 // pred_check_branch
          %1168 = sbr.rel (%p1166) target = $region56
        $region55: #{tpu_custom_call.1} parent=51 // pred_region
          %s1169 = sand.u32 %s135, 1
          %s1170 = scalar_lea.sflag [#allocation3], %s1169
          %s1171 = sand.u32 %s135, 1
          %s1172 = smul.addr %s1171, 16
          %s1173 = scalar_lea.vmem [#allocation2], %s1172
          %1174 = dma.done %s1170, 256
        $region56: #{tpu_custom_call.1} parent=51 // pred_fallthru
          _
        // Predicated region
        $region57: #{tpu_custom_call.1} parent=51 // pred_check
          %p1175 = pneg %p178
        $region58: #{tpu_custom_call.1} parent=51 // pred_check_branch
          %1177 = sbr.rel (%p1175) target = $region60
        $region59: #{tpu_custom_call.1} parent=51 // pred_region
          %p1178 = scmp.lt.s32.totalorder %s27, 1
          %s1179 = scalar_select %p1178, %s27, 1
          %p1180 = scmp.lt.s32.totalorder %s28, 0
          %s1181 = scalar_select %p1180, %s28, 0
          %s1182 = smul.addr %s1181, 2
          %s1183 = smul.addr %s1179, 2
          %s1184 = sadd.s32 %s1182, %s1183
          %s1185 = smul.addr %s1184, 8
          %s1186 = scalar_lea.vmem %s5, %s1185
        $region60: #{tpu_custom_call.1} parent=51 // pred_fallthru
          _
        // Predicated region
        $region61: #{tpu_custom_call.1} parent=51 // pred_check
          %p1187 = pneg %p206
        $region62: #{tpu_custom_call.1} parent=51 // pred_check_branch
          %1189 = sbr.rel (%p1187) target = $region64
        $region63: #{tpu_custom_call.1} parent=51 // pred_region
          %p1190 = scmp.lt.s32.totalorder %s27, 1
          %s1191 = scalar_select %p1190, %s27, 1
          %p1192 = scmp.lt.s32.totalorder %s28, 0
          %s1193 = scalar_select %p1192, %s28, 0
          %s1194 = smul.addr %s1193, 2
          %s1195 = smul.addr %s1191, 2
          %s1196 = sadd.s32 %s1194, %s1195
          %s1197 = smul.addr %s1196, 8
          %s1198 = scalar_lea.vmem %s6, %s1197
        $region64: #{tpu_custom_call.1} parent=51 // pred_fallthru
          _
      $region52: #{tpu_custom_call.1} parent=5 // pred_fallthru
        _
    $region6: #{tpu_custom_call.1} parent=1 // loop_footer
      %s20 = sadd.s32 1, %s16
    $region7: #{tpu_custom_call.1} parent=1 // loop_footer_branch
      %15 = sbr.rel target = $region3
    $region8: #{tpu_custom_call.1} parent=1 // loop_exit
      _
    %1199 = vsyncpa [#allocation3], 1
    %s1200 = scalar_lea.sflag [#allocation3], 1
    %1201 = vsyncpa %s1200, 1

</llo_original>
